<compile_context>
chip_gen: v7x
topology: tpu7x:2x2x1
jax: 0.10.0
libtpu: 0.0.40
codegen_flags: <defaults>
</compile_context>

<pallas_src>
import jax
import jax.numpy as jnp
from jax.experimental import pallas as pl
from jax.experimental.pallas import tpu as pltpu


_LANES = 128
_DEFAULT_TILE_PACKED_ROWS = 4096  # 4096 packed rows == 2 MiB x block (f32, 128 lanes)


def _linear_kernel(x_ref, w_ref, b_ref, o_ref):
    # x_ref: (TB, Dp)   streamed batch tile (packed rows on sublanes, features on lanes)
    # w_ref: (OUTp, Dp) resident block-diagonal weight
    # b_ref: (OUTp, 1)  resident bias
    # o_ref: (OUTp, TB) lane-dense output (batch on the lane axis)
    #
    # out[j, b] = sum_k w[j, k] * x[b, k]   (A @ B^T: MXU-friendly, result lane-dense)
    o_ref[...] = (
        jax.lax.dot_general(
            w_ref[...],
            x_ref[...],
            dimension_numbers=(((1,), (1,)), ((), ())),
            preferred_element_type=jnp.float32,
        )
        + b_ref[...]
    )


def _choose_tile(bp_raw, tile_packed_rows):
    """Pick the packed-row tile size."""
    if bp_raw <= 2 * _LANES:
        # Tiny problem: a single block covering the whole (possibly ragged) array.
        return bp_raw
    # Large lane-aligned tiles, but capped so the grid has >= 2 steps (v7x megacore).
    half = (bp_raw + 1) // 2
    tb = min(tile_packed_rows, half)
    tb = max(_LANES, (tb // _LANES) * _LANES)
    return tb


def logistic_regression_forward(
    x, weight, bias, *, tile_packed_rows=_DEFAULT_TILE_PACKED_ROWS
):
    """Computes x @ weight.T + bias, exactly like nn.Linear(input_dim, 2).

    x:      (B, D)   float32
    weight: (O, D)   float32 (PyTorch layout: (out_features, in_features))
    bias:   (O,)     float32
    returns (B, O)   float32 logits (no activation, matching forward()).
    """
    B, D = x.shape
    out_dim = weight.shape[0]

    # Lane-packing factor: how many logical rows share one 128-lane VMEM row.
    if D < _LANES and _LANES % D == 0:
        pack = _LANES // D
    else:
        pack = 1  # fallback for awkward feature widths (correct, just lane-sparse)
    d_p = pack * D
    out_p = pack * out_dim

    # Tail-pad only (<= pack-1 rows) so the lane-packing reshape is legal; no full copy
    # of x when B is already a multiple of `pack`.
    rem = B % pack
    if rem:
        x = jnp.concatenate([x, jnp.zeros((pack - rem, D), x.dtype)], axis=0)
    bp_raw = x.shape[0] // pack
    x_packed = x.reshape(bp_raw, d_p)  # metadata-only row-major collapse

    # Resident weight / bias in kernel-friendly layout.
    #   w_t[j, k] with j = p*out_dim + o : block-diagonal kron(I_pack, weight)
    w_t = jnp.kron(jnp.eye(pack, dtype=weight.dtype), weight)      # (out_p, d_p)
    b_packed = jnp.tile(bias, pack).reshape(out_p, 1)               # (out_p, 1)

    tb = _choose_tile(bp_raw, tile_packed_rows)
    grid = -(-bp_raw // tb)
    n_cols = grid * tb  # output never ragged on writes; extra columns sliced away

    out_packed = pl.pallas_call(
        _linear_kernel,
        out_shape=jax.ShapeDtypeStruct((out_p, n_cols), jnp.float32),
        grid=(grid,),
        in_specs=[
            pl.BlockSpec((tb, d_p), lambda i: (i, 0)),      # streamed x tiles
            pl.BlockSpec((out_p, d_p), lambda i: (0, 0)),   # weight resident in VMEM
            pl.BlockSpec((out_p, 1), lambda i: (0, 0)),     # bias resident in VMEM
        ],
        out_specs=pl.BlockSpec((out_p, tb), lambda i: (0, i)),  # lane-dense writeback
        compiler_params=pltpu.CompilerParams(
            dimension_semantics=("parallel",),
        ),
    )(x_packed, w_t, b_packed)

    # Tiny unpack: (out_p, n_cols) -> (bp_raw, out_p) -> (bp_raw*pack, out_dim) -> (B, out_dim)
    logits = out_packed[:, :bp_raw].T.reshape(bp_raw * pack, out_dim)
    return logits[:B]


if __name__ == "__main__":
    key = jax.random.PRNGKey(0)
    k_x, k_w, k_b, k_x2, k_x3 = jax.random.split(key, 5)

    batch = 8
    input_dim = 32   # X_train.shape[1] in the original script
    out_dim = 2      # nn.Linear(input_dim, 2)

    # Deterministic parameter init mimicking nn.Linear's U(-1/sqrt(D), 1/sqrt(D)).
    bound = 1.0 / (input_dim ** 0.5)
    weight = jax.random.uniform(
        k_w, (out_dim, input_dim), jnp.float32, minval=-bound, maxval=bound
    )
    bias = jax.random.uniform(
        k_b, (out_dim,), jnp.float32, minval=-bound, maxval=bound
    )

    # Small canonical case.
    x = jax.random.normal(k_x, (batch, input_dim), jnp.float32)
    out = jax.block_until_ready(logistic_regression_forward(x, weight, bias))
    ref = x @ weight.T + bias
    assert out.shape == (batch, out_dim)
    assert jnp.allclose(out, ref, atol=1e-5, rtol=1e-5)

    # Odd batch: exercises the <=3-row tail pad + lane-packing path.
    x_odd = jax.random.normal(k_x2, (7, input_dim), jnp.float32)
    out_odd = jax.block_until_ready(logistic_regression_forward(x_odd, weight, bias))
    assert jnp.allclose(out_odd, x_odd @ weight.T + bias, atol=1e-5, rtol=1e-5)

    # Larger batch: multi-tile grid with a ragged last x block (boundary padding path).
    x_big = jax.random.normal(k_x3, (4102, input_dim), jnp.float32)
    out_big = jax.block_until_ready(
        logistic_regression_forward(x_big, weight, bias, tile_packed_rows=512)
    )
    assert jnp.allclose(out_big, x_big @ weight.T + bias, atol=1e-4, rtol=1e-5)

    print("KERNEL_OK")
</pallas_src>

<mosaic_0001>
module attributes {stable_mosaic.version = 11 : i64} {
  func.func @_linear_kernel(%arg0: i32, %arg1: memref<2x128xf32, #tpu.memory_space<vmem>>, %arg2: memref<8x128xf32, #tpu.memory_space<vmem>>, %arg3: memref<8x1xf32, #tpu.memory_space<vmem>>, %arg4: memref<8x2xf32, #tpu.memory_space<vmem>>) attributes {dimension_semantics = [#tpu.dimension_semantics<parallel>], iteration_bounds = array<i64: 1>, scalar_prefetch = 0 : i64, scratch_operands = 0 : i64, tpu.core_type = #tpu.core_type<tc>, window_params = [{transform_indices = @transform_0, window_bounds = array<i64: 2, 128>}, {pipeline_mode = #tpu.pipeline_mode<synchronous>, transform_indices = @transform_1, window_bounds = array<i64: 8, 128>}, {pipeline_mode = #tpu.pipeline_mode<synchronous>, transform_indices = @transform_2, window_bounds = array<i64: 8, 1>}, {transform_indices = @transform_3, window_bounds = array<i64: 8, 2>}]} {
    %c0 = arith.constant 0 : index
    %c0_0 = arith.constant 0 : index
    %0 = vector.load %arg2[%c0, %c0_0] : memref<8x128xf32, #tpu.memory_space<vmem>>, vector<8x128xf32>
    %c0_1 = arith.constant 0 : index
    %c0_2 = arith.constant 0 : index
    %1 = vector.load %arg1[%c0_1, %c0_2] : memref<2x128xf32, #tpu.memory_space<vmem>>, vector<2x128xf32>
    %cst = arith.constant dense<0.000000e+00> : vector<8x2xf32>
    %2 = tpu.matmul %0, %1, %cst {dimension_numbers = #tpu.dot_dimension_numbers<[1], [1], [0], [0], [0, 0, 1, 0], [], []>} : vector<8x128xf32>, vector<2x128xf32>, vector<8x2xf32> -> vector<8x2xf32>
    %c0_3 = arith.constant 0 : index
    %c0_4 = arith.constant 0 : index
    %3 = vector.load %arg3[%c0_3, %c0_4] : memref<8x1xf32, #tpu.memory_space<vmem>>, vector<8x1xf32>
    %4 = vector.broadcast %3 : vector<8x1xf32> to vector<8x2xf32>
    %5 = arith.addf %2, %4 : vector<8x2xf32>
    %c0_5 = arith.constant 0 : index
    %c0_6 = arith.constant 0 : index
    %6 = vector.load %arg4[%c0_5, %c0_6] : memref<8x2xf32, #tpu.memory_space<vmem>>, vector<8x2xf32>
    tpu.vector_store %arg4[%c0_5, %c0_6], %5 {strides = array<i32>} : memref<8x2xf32, #tpu.memory_space<vmem>>, vector<8x2xf32>,
    return
  }
  func.func @transform_0(%arg0: i32) -> (i32, i32) {
    %c0_i32 = arith.constant 0 : i32
    %c0_i32_0 = arith.constant 0 : i32
    return %arg0, %c0_i32 : i32, i32
  }
  func.func @transform_1(%arg0: i32) -> (i32, i32) {
    %c0_i32 = arith.constant 0 : i32
    %c0_i32_0 = arith.constant 0 : i32
    %c0_i32_1 = arith.constant 0 : i32
    return %c0_i32, %c0_i32_0 : i32, i32
  }
  func.func @transform_2(%arg0: i32) -> (i32, i32) {
    %c0_i32 = arith.constant 0 : i32
    %c0_i32_0 = arith.constant 0 : i32
    %c0_i32_1 = arith.constant 0 : i32
    return %c0_i32, %c0_i32_0 : i32, i32
  }
  func.func @transform_3(%arg0: i32) -> (i32, i32) {
    %c0_i32 = arith.constant 0 : i32
    %c0_i32_0 = arith.constant 0 : i32
    return %c0_i32, %arg0 : i32, i32
  }
}

</mosaic_0001>

<llo_original>
// kernel: tpu_custom_call.1
$region0: #{tpu_custom_call.1}
  #allocation0 [shape = 'u32[]', space=smem, size = 0x4, offset = 0x4, fixed_abs, tag = 'smem constant byte address 0x4 - core index']
  #allocation1 [shape = 'u32[144,128]{1,0:T(1,128)}', space=vmem, size = 0x12000, scoped, tag = 'internal scratch']
  %s0 = inlined_call_operand.vmem [shape: f32[2,128], index: 0, kind: input, shape index: {}]
  %s1 = inlined_call_operand.vmem [shape: f32[8,128], index: 1, kind: input, shape index: {}]
  %s2 = inlined_call_operand.vmem [shape: f32[8,1], index: 2, kind: input, shape index: {}]
  %s3 = inlined_call_operand.vmem [shape: f32[8,2], index: 3, kind: output, shape index: {}]
  %s4 = sld [smem:[#allocation0]]
  $region22: #{tpu_custom_call.1} parent=0
    _
  %s6 = ssub.s32 1, %s4
  %s7 = scalar_select 0, %s6, %s4
  // Predicated region
  $region2: #{tpu_custom_call.1} parent=0 // pred_check
    _
  $region3: #{tpu_custom_call.1} parent=0 // pred_check_branch
    %9 = sbr.rel (0) target = $region5
  $region4: #{tpu_custom_call.1} parent=0 // pred_region
    _
  $region5: #{tpu_custom_call.1} parent=0 // pred_fallthru
    _
  // Predicated region
  $region6: #{tpu_custom_call.1} parent=0 // pred_check
    _
  $region7: #{tpu_custom_call.1} parent=0 // pred_check_branch
    %11 = sbr.rel (0) target = $region9
  $region8: #{tpu_custom_call.1} parent=0 // pred_region
    _
  $region9: #{tpu_custom_call.1} parent=0 // pred_fallthru
    _
  // Predicated region
  $region10: #{tpu_custom_call.1} parent=0 // pred_check
    _
  $region11: #{tpu_custom_call.1} parent=0 // pred_check_branch
    %13 = sbr.rel (0) target = $region13
  $region12: #{tpu_custom_call.1} parent=0 // pred_region
    _
  $region13: #{tpu_custom_call.1} parent=0 // pred_fallthru
    _
  %v14 = vld [vmem:[%s1] sm:$0xff]
  %v15 = vld [vmem:[%s0] sm:$0x3]
  %v16 = vld [vmem:[%s2] sm:$0xff]
  %18 = vset.pattern.permute.xlu0 0
  %19 = vperm.xlu0 %18, %v16
  %v20 = vpop.permute.xlu0 %19
  %22 = vmatprep.subr.mxu0 0.0
  %23 = vmatpush1.xpose.msra.mxu0 %v15
  %24 = vmatprep.subr.mxu0 0.0
  %25 = vmatpush1.xpose.msra.mxu0 0.0
  %26 = vmatprep.subr.mxu0 0.0
  %27 = vmatpush1.xpose.msra.mxu0 0.0
  %28 = vmatprep.subr.mxu0 0.0
  %29 = vmatpush1.xpose.msra.mxu0 0.0
  %30 = vmatprep.subr.mxu0 0.0
  %31 = vmatpush1.xpose.msra.mxu0 0.0
  %32 = vmatprep.subr.mxu0 0.0
  %33 = vmatpush1.xpose.msra.mxu0 0.0
  %34 = vmatprep.subr.mxu0 0.0
  %35 = vmatpush1.xpose.msra.mxu0 0.0
  %36 = vmatprep.subr.mxu0 0.0
  %37 = vmatpush1.xpose.msra.mxu0 0.0
  %38 = vmatprep.subr.mxu0 0.0
  %39 = vmatpush1.xpose.msra.mxu0 0.0
  %40 = vmatprep.subr.mxu0 0.0
  %41 = vmatpush1.xpose.msra.mxu0 0.0
  %42 = vmatprep.subr.mxu0 0.0
  %43 = vmatpush1.xpose.msra.mxu0 0.0
  %44 = vmatprep.subr.mxu0 0.0
  %45 = vmatpush1.xpose.msra.mxu0 0.0
  %46 = vmatprep.subr.mxu0 0.0
  %47 = vmatpush1.xpose.msra.mxu0 0.0
  %48 = vmatprep.subr.mxu0 0.0
  %49 = vmatpush1.xpose.msra.mxu0 0.0
  %50 = vmatprep.subr.mxu0 0.0
  %51 = vmatpush1.xpose.msra.mxu0 0.0
  %52 = vmatprep.subr.mxu0 0.0
  %53 = vmatpush1.xpose.msra.mxu0 0.0
  %54 = vmatprep.subr.mxu0 0.0
  %55 = vmatpush1.xpose.msra.mxu0 0.0
  %56 = vmatprep.subr.mxu0 0.0
  %57 = vmatpush1.xpose.msra.mxu0 0.0
  %58 = vmatprep.subr.mxu0 0.0
  %59 = vmatpush1.xpose.msra.mxu0 0.0
  %60 = vmatprep.subr.mxu0 0.0
  %61 = vmatpush1.xpose.msra.mxu0 0.0
  %62 = vmatprep.subr.mxu0 0.0
  %63 = vmatpush1.xpose.msra.mxu0 0.0
  %64 = vmatprep.subr.mxu0 0.0
  %65 = vmatpush1.xpose.msra.mxu0 0.0
  %66 = vmatprep.subr.mxu0 0.0
  %67 = vmatpush1.xpose.msra.mxu0 0.0
  %68 = vmatprep.subr.mxu0 0.0
  %69 = vmatpush1.xpose.msra.mxu0 0.0
  %70 = vmatprep.subr.mxu0 0.0
  %71 = vmatpush1.xpose.msra.mxu0 0.0
  %72 = vmatprep.subr.mxu0 0.0
  %73 = vmatpush1.xpose.msra.mxu0 0.0
  %74 = vmatprep.subr.mxu0 0.0
  %75 = vmatpush1.xpose.msra.mxu0 0.0
  %76 = vmatprep.subr.mxu0 0.0
  %77 = vmatpush1.xpose.msra.mxu0 0.0
  %78 = vmatprep.subr.mxu0 0.0
  %79 = vmatpush1.xpose.msra.mxu0 0.0
  %80 = vmatprep.subr.mxu0 0.0
  %81 = vmatpush1.xpose.msra.mxu0 0.0
  %82 = vmatprep.subr.mxu0 0.0
  %83 = vmatpush1.xpose.msra.mxu0 0.0
  %84 = vmatprep.subr.mxu0 0.0
  %85 = vmatpush1.xpose.msra.mxu0 0.0
  %86 = vmatprep.mubr.f32.mxu0 0.0
  %87 = vmatmul.mubr.f32.gmra.mrb[0].mxu0 %v14
  %v88 = vpop.f32.mrb[0].mxu0
  %v89 = vadd.f32 %v20, %v88
  %v90 = vpop.f32.mrb[0].mxu0
  %91 = vdwg.mxu0
  %vm92 = vcmask 15360
  %93 = vst.msk [vmem:[%s3] sm:$0xff] %vm92, %v89
  // Predicated region
  $region14: #{tpu_custom_call.1} parent=0 // pred_check
    _
  $region15: #{tpu_custom_call.1} parent=0 // pred_check_branch
    %95 = sbr.rel (0) target = $region17
  $region16: #{tpu_custom_call.1} parent=0 // pred_region
    _
  $region17: #{tpu_custom_call.1} parent=0 // pred_fallthru
    _
  // Predicated region
  $region18: #{tpu_custom_call.1} parent=0 // pred_check
    _
  $region19: #{tpu_custom_call.1} parent=0 // pred_check_branch
    %97 = sbr.rel (0) target = $region21
  $region20: #{tpu_custom_call.1} parent=0 // pred_region
    _
  $region21: #{tpu_custom_call.1} parent=0 // pred_fallthru
    _

</llo_original>
